<compile_context>
chip_gen: v7x
topology: tpu7x:2x2x1
jax: 0.10.0
libtpu: 0.0.40
codegen_flags: <defaults>
</compile_context>

<pallas_src>
import functools

import jax
import jax.numpy as jnp
from jax import lax
from jax.experimental import pallas as pl
from jax.experimental.pallas import tpu as pltpu


def _round_up(n, m):
    return ((n + m - 1) // m) * m


def _mlp_kernel(x_ref, w1_ref, b1_ref, w2_ref, b2_ref, *out_refs):
    # x_ref: (15, TB)  w1_ref: (8, 15)  b1_ref: (8, 1)  w2_ref: (3, 8)  b2_ref: (3, 1)
    # out_refs: (out (3, TB),) or (out (3, TB), hid (8, TB)) -- all lane-dense.
    x = x_ref[...].astype(jnp.float32)
    # layer 1: (8,15) @ (15,TB) + (8,1) -> sigmoid   (f32 accumulation)
    h = jnp.dot(w1_ref[...].astype(jnp.float32), x,
                preferred_element_type=jnp.float32,
                precision=lax.Precision.HIGHEST)
    h = jax.nn.sigmoid(h + b1_ref[...].astype(jnp.float32))
    # layer 2: (3,8) @ (8,TB) + (3,1) -> sigmoid
    o = jnp.dot(w2_ref[...].astype(jnp.float32), h,
                preferred_element_type=jnp.float32,
                precision=lax.Precision.HIGHEST)
    o = jax.nn.sigmoid(o + b2_ref[...].astype(jnp.float32))
    out_refs[0][...] = o.astype(out_refs[0].dtype)
    if len(out_refs) == 2:                       # optional "self.midle[0]" writeback
        out_refs[1][...] = h.astype(out_refs[1].dtype)


@functools.partial(jax.jit, static_argnames=("return_hidden", "out_dtype", "tb"))
def simple_brain_forward_fm(x_fm, w1, b1, w2, b2, *,
                            return_hidden=True, out_dtype=None, tb=32768):
    """Feature-major forward (the bandwidth-optimal path).

    x_fm: (15, B)   -- batch on the minor (lane) axis.
    w1:   (8, 15), b1: (8,)   (PyTorch nn.Linear(15, 8) layout)
    w2:   (3, 8),  b2: (3,)   (PyTorch nn.Linear(8, 3)  layout)
    Returns out (3, B) [, hidden (8, B)] in out_dtype (default: x_fm.dtype).
    """
    in_f, B = x_fm.shape
    assert in_f == 15, "expected feature-major input of shape (15, B)"
    out_dtype = x_fm.dtype if out_dtype is None else out_dtype

    # Batch tiling: pad only up to a multiple of 128, split into >= 2 grid steps
    # whenever possible (v7x megacore), cap each step at ~tb lanes.
    b128 = _round_up(B, 128)
    num_steps = max(pl.cdiv(b128, tb), 2 if b128 >= 256 else 1)
    tb = _round_up(pl.cdiv(b128, num_steps), 128)
    b_pad = num_steps * tb

    if b_pad != B:
        x_fm = jnp.pad(x_fm, ((0, 0), (0, b_pad - B)))

    b1c = jnp.reshape(b1, (8, 1))
    b2c = jnp.reshape(b2, (3, 1))

    const_map = lambda i: (0, 0)
    batch_map = lambda i: (0, i)

    out_shapes = [jax.ShapeDtypeStruct((3, b_pad), out_dtype)]
    out_specs = [pl.BlockSpec((3, tb), batch_map)]
    if return_hidden:
        out_shapes.append(jax.ShapeDtypeStruct((8, b_pad), out_dtype))
        out_specs.append(pl.BlockSpec((8, tb), batch_map))

    x_bytes = x_fm.dtype.itemsize
    o_bytes = jnp.dtype(out_dtype).itemsize
    cost = pl.CostEstimate(
        flops=2 * b_pad * (15 * 8 + 8 * 3),
        transcendentals=(8 + 3) * b_pad,
        bytes_accessed=15 * b_pad * x_bytes
        + (3 + (8 if return_hidden else 0)) * b_pad * o_bytes
        + (8 * 15 + 8 + 3 * 8 + 3) * 4,
    )

    results = pl.pallas_call(
        _mlp_kernel,
        out_shape=tuple(out_shapes),
        grid=(num_steps,),
        in_specs=[
            pl.BlockSpec((15, tb), batch_map),   # x tile, streamed (15 == full dim -> legal)
            pl.BlockSpec((8, 15), const_map),    # W1, VMEM-resident across the grid
            pl.BlockSpec((8, 1), const_map),     # b1
            pl.BlockSpec((3, 8), const_map),     # W2
            pl.BlockSpec((3, 1), const_map),     # b2
        ],
        out_specs=tuple(out_specs),
        compiler_params=pltpu.CompilerParams(
            dimension_semantics=("parallel",),   # megacore sharding on v7x; no-op v5e/v6e
        ),
        cost_estimate=cost,
    )(x_fm, w1, b1c, w2, b2c)

    out_fm = results[0][:, :B] if b_pad != B else results[0]
    if return_hidden:
        hid_fm = results[1][:, :B] if b_pad != B else results[1]
        return out_fm, hid_fm
    return out_fm


def simple_brain_forward(x, w1, b1, w2, b2, *,
                         return_hidden=True, out_dtype=None, tb=32768):
    """PyTorch-compatible interface: x (B, 15) -> out (B, 3) [, hidden (B, 8)].

    NOTE: this re-introduces one input and one output transpose around the
    kernel; bandwidth-sensitive callers should use simple_brain_forward_fm.
    """
    res = simple_brain_forward_fm(x.T, w1, b1, w2, b2,
                                  return_hidden=return_hidden,
                                  out_dtype=out_dtype, tb=tb)
    if return_hidden:
        out_fm, hid_fm = res
        return out_fm.T, hid_fm.T
    return res.T


def init_params(key):
    """Deterministic init mimicking nn.Linear's U(-1/sqrt(fan_in), 1/sqrt(fan_in)).

    Weights are stored in native PyTorch (out_features, in_features) layout.
    """
    k1, k2, k3, k4 = jax.random.split(key, 4)
    bound1 = 1.0 / jnp.sqrt(15.0)
    bound2 = 1.0 / jnp.sqrt(8.0)
    w1 = jax.random.uniform(k1, (8, 15), jnp.float32, -bound1, bound1)
    b1 = jax.random.uniform(k2, (8,), jnp.float32, -bound1, bound1)
    w2 = jax.random.uniform(k3, (3, 8), jnp.float32, -bound2, bound2)
    b2 = jax.random.uniform(k4, (3,), jnp.float32, -bound2, bound2)
    return w1, b1, w2, b2


if __name__ == "__main__":
    key = jax.random.PRNGKey(0)
    kx, kp = jax.random.split(key)
    B = 2
    x = jax.random.normal(kx, (B, 15), jnp.float32)     # PyTorch-style (batch, features)
    w1, b1, w2, b2 = init_params(kp)

    # Pure-JAX reference (PyTorch semantics: sigmoid(x @ W.T + b)).
    ref_h = jax.nn.sigmoid(x @ w1.T + b1)
    ref_o = jax.nn.sigmoid(ref_h @ w2.T + b2)

    # 1) Core feature-major path (no transposes anywhere around the kernel).
    out_fm, hid_fm = simple_brain_forward_fm(x.T, w1, b1, w2, b2)
    out_fm = jax.block_until_ready(out_fm)
    hid_fm = jax.block_until_ready(hid_fm)
    assert out_fm.shape == (3, B) and hid_fm.shape == (8, B)
    assert jnp.allclose(out_fm.T, ref_o, atol=1e-5), "fm output mismatch"
    assert jnp.allclose(hid_fm.T, ref_h, atol=1e-5), "fm hidden mismatch"

    # 2) Batch-major compatibility wrapper (original module interface).
    out, hidden = simple_brain_forward(x, w1, b1, w2, b2)
    out = jax.block_until_ready(out)
    hidden = jax.block_until_ready(hidden)
    assert out.shape == (B, 3) and hidden.shape == (B, 8)
    assert jnp.allclose(out, ref_o, atol=1e-5), "bm output mismatch"
    assert jnp.allclose(hidden, ref_h, atol=1e-5), "bm hidden mismatch"

    # 3) Narrow-I/O, no-hidden serving configuration (bf16 storage, f32 compute).
    out_bf16 = simple_brain_forward_fm(
        x.T.astype(jnp.bfloat16), w1, b1, w2, b2,
        return_hidden=False, out_dtype=jnp.bfloat16)
    out_bf16 = jax.block_until_ready(out_bf16)
    assert out_bf16.shape == (3, B)
    assert jnp.allclose(out_bf16.astype(jnp.float32).T, ref_o, atol=3e-2), \
        "bf16 output mismatch"

    # TODO(synk): predict()'s argmax-to-{-1,0,1} branching stays host-side (not a kernel op).
    print("KERNEL_OK")
</pallas_src>

<mosaic_0001>
module attributes {stable_mosaic.version = 11 : i64} {
  func.func @_mlp_kernel(%arg0: i32, %arg1: memref<15x128xf32, #tpu.memory_space<vmem>>, %arg2: memref<8x15xf32, #tpu.memory_space<vmem>>, %arg3: memref<8x1xf32, #tpu.memory_space<vmem>>, %arg4: memref<3x8xf32, #tpu.memory_space<vmem>>, %arg5: memref<3x1xf32, #tpu.memory_space<vmem>>, %arg6: memref<3x128xf32, #tpu.memory_space<vmem>>, %arg7: memref<8x128xf32, #tpu.memory_space<vmem>>) attributes {dimension_semantics = [#tpu.dimension_semantics<parallel>], iteration_bounds = array<i64: 1>, scalar_prefetch = 0 : i64, scratch_operands = 0 : i64, tpu.core_type = #tpu.core_type<tc>, window_params = [{transform_indices = @transform_0, window_bounds = array<i64: 15, 128>}, {pipeline_mode = #tpu.pipeline_mode<synchronous>, transform_indices = @transform_1, window_bounds = array<i64: 8, 15>}, {pipeline_mode = #tpu.pipeline_mode<synchronous>, transform_indices = @transform_2, window_bounds = array<i64: 8, 1>}, {pipeline_mode = #tpu.pipeline_mode<synchronous>, transform_indices = @transform_3, window_bounds = array<i64: 3, 8>}, {pipeline_mode = #tpu.pipeline_mode<synchronous>, transform_indices = @transform_4, window_bounds = array<i64: 3, 1>}, {transform_indices = @transform_5, window_bounds = array<i64: 3, 128>}, {transform_indices = @transform_6, window_bounds = array<i64: 8, 128>}]} {
    %c0 = arith.constant 0 : index
    %c0_0 = arith.constant 0 : index
    %0 = vector.load %arg1[%c0, %c0_0] : memref<15x128xf32, #tpu.memory_space<vmem>>, vector<15x128xf32>
    %c0_1 = arith.constant 0 : index
    %c0_2 = arith.constant 0 : index
    %1 = vector.load %arg2[%c0_1, %c0_2] : memref<8x15xf32, #tpu.memory_space<vmem>>, vector<8x15xf32>
    %cst = arith.constant dense<0.000000e+00> : vector<8x128xf32>
    %2 = tpu.matmul %1, %0, %cst {dimension_numbers = #tpu.dot_dimension_numbers<[1], [0], [0], [1], [0, 0, 1, 1], [], []>, precision = #tpu.contract_precision<fp32>} : vector<8x15xf32>, vector<15x128xf32>, vector<8x128xf32> -> vector<8x128xf32>
    %c0_3 = arith.constant 0 : index
    %c0_4 = arith.constant 0 : index
    %3 = vector.load %arg3[%c0_3, %c0_4] : memref<8x1xf32, #tpu.memory_space<vmem>>, vector<8x1xf32>
    %4 = vector.broadcast %3 : vector<8x1xf32> to vector<8x128xf32>
    %5 = arith.addf %2, %4 : vector<8x128xf32>
    %6 = arith.negf %5 : vector<8x128xf32>
    %7 = math.exp %6 : vector<8x128xf32>
    %cst_5 = arith.constant 1.000000e+00 : f32
    %8 = vector.broadcast %cst_5 : f32 to vector<8x128xf32>
    %9 = arith.addf %8, %7 : vector<8x128xf32>
    %10 = arith.divf %8, %9 : vector<8x128xf32>
    %c0_6 = arith.constant 0 : index
    %c0_7 = arith.constant 0 : index
    %11 = vector.load %arg4[%c0_6, %c0_7] : memref<3x8xf32, #tpu.memory_space<vmem>>, vector<3x8xf32>
    %cst_8 = arith.constant dense<0.000000e+00> : vector<3x128xf32>
    %12 = tpu.matmul %11, %10, %cst_8 {dimension_numbers = #tpu.dot_dimension_numbers<[1], [0], [0], [1], [0, 0, 1, 1], [], []>, precision = #tpu.contract_precision<fp32>} : vector<3x8xf32>, vector<8x128xf32>, vector<3x128xf32> -> vector<3x128xf32>
    %c0_9 = arith.constant 0 : index
    %c0_10 = arith.constant 0 : index
    %13 = vector.load %arg5[%c0_9, %c0_10] : memref<3x1xf32, #tpu.memory_space<vmem>>, vector<3x1xf32>
    %14 = vector.broadcast %13 : vector<3x1xf32> to vector<3x128xf32>
    %15 = arith.addf %12, %14 : vector<3x128xf32>
    %16 = arith.negf %15 : vector<3x128xf32>
    %17 = math.exp %16 : vector<3x128xf32>
    %cst_11 = arith.constant 1.000000e+00 : f32
    %18 = vector.broadcast %cst_11 : f32 to vector<3x128xf32>
    %19 = arith.addf %18, %17 : vector<3x128xf32>
    %20 = arith.divf %18, %19 : vector<3x128xf32>
    %c0_12 = arith.constant 0 : index
    %c0_13 = arith.constant 0 : index
    %21 = vector.load %arg6[%c0_12, %c0_13] : memref<3x128xf32, #tpu.memory_space<vmem>>, vector<3x128xf32>
    tpu.vector_store %arg6[%c0_12, %c0_13], %20 {strides = array<i32>} : memref<3x128xf32, #tpu.memory_space<vmem>>, vector<3x128xf32>,
    %c0_14 = arith.constant 0 : index
    %c0_15 = arith.constant 0 : index
    %22 = vector.load %arg7[%c0_14, %c0_15] : memref<8x128xf32, #tpu.memory_space<vmem>>, vector<8x128xf32>
    tpu.vector_store %arg7[%c0_14, %c0_15], %10 {strides = array<i32>} : memref<8x128xf32, #tpu.memory_space<vmem>>, vector<8x128xf32>,
    return
  }
  func.func @transform_0(%arg0: i32) -> (i32, i32) {
    %c0_i32 = arith.constant 0 : i32
    %c0_i32_0 = arith.constant 0 : i32
    return %c0_i32, %arg0 : i32, i32
  }
  func.func @transform_1(%arg0: i32) -> (i32, i32) {
    %c0_i32 = arith.constant 0 : i32
    %c0_i32_0 = arith.constant 0 : i32
    %c0_i32_1 = arith.constant 0 : i32
    return %c0_i32, %c0_i32_0 : i32, i32
  }
  func.func @transform_2(%arg0: i32) -> (i32, i32) {
    %c0_i32 = arith.constant 0 : i32
    %c0_i32_0 = arith.constant 0 : i32
    %c0_i32_1 = arith.constant 0 : i32
    return %c0_i32, %c0_i32_0 : i32, i32
  }
  func.func @transform_3(%arg0: i32) -> (i32, i32) {
    %c0_i32 = arith.constant 0 : i32
    %c0_i32_0 = arith.constant 0 : i32
    %c0_i32_1 = arith.constant 0 : i32
    return %c0_i32, %c0_i32_0 : i32, i32
  }
  func.func @transform_4(%arg0: i32) -> (i32, i32) {
    %c0_i32 = arith.constant 0 : i32
    %c0_i32_0 = arith.constant 0 : i32
    %c0_i32_1 = arith.constant 0 : i32
    return %c0_i32, %c0_i32_0 : i32, i32
  }
  func.func @transform_5(%arg0: i32) -> (i32, i32) {
    %c0_i32 = arith.constant 0 : i32
    %c0_i32_0 = arith.constant 0 : i32
    return %c0_i32, %arg0 : i32, i32
  }
  func.func @transform_6(%arg0: i32) -> (i32, i32) {
    %c0_i32 = arith.constant 0 : i32
    %c0_i32_0 = arith.constant 0 : i32
    return %c0_i32, %arg0 : i32, i32
  }
}

</mosaic_0001>

<llo_original>
// kernel: simple_brain_forward_fm.1
$region0: #{simple_brain_forward_fm.1}
  #allocation0 [shape = 'u32[]', space=smem, size = 0x4, offset = 0x4, fixed_abs, tag = 'smem constant byte address 0x4 - core index']
  #allocation1 [shape = 'u32[144,128]{1,0:T(1,128)}', space=vmem, size = 0x12000, scoped, tag = 'internal scratch']
  %s0 = inlined_call_operand.vmem [shape: f32[15,128], index: 0, kind: input, shape index: {}]
  %s1 = inlined_call_operand.vmem [shape: f32[8,15], index: 1, kind: input, shape index: {}]
  %s2 = inlined_call_operand.vmem [shape: f32[8,1], index: 2, kind: input, shape index: {}]
  %s3 = inlined_call_operand.vmem [shape: f32[3,8], index: 3, kind: input, shape index: {}]
  %s4 = inlined_call_operand.vmem [shape: f32[3,1], index: 4, kind: input, shape index: {}]
  %s5 = inlined_call_operand.vmem [shape: f32[3,128], index: 5, kind: output, shape index: {0}]
  %s6 = inlined_call_operand.vmem [shape: f32[8,128], index: 6, kind: output, shape index: {1}]
  %7 = xla_tuple %s5, %s6
  %s8 = sld [smem:[#allocation0]]
  $region38: #{simple_brain_forward_fm.1} parent=0
    _
  %s10 = ssub.s32 1, %s8
  %s11 = scalar_select 0, %s10, %s8
  // Predicated region
  $region2: #{simple_brain_forward_fm.1} parent=0 // pred_check
    _
  $region3: #{simple_brain_forward_fm.1} parent=0 // pred_check_branch
    %13 = sbr.rel (0) target = $region5
  $region4: #{simple_brain_forward_fm.1} parent=0 // pred_region
    _
  $region5: #{simple_brain_forward_fm.1} parent=0 // pred_fallthru
    _
  // Predicated region
  $region6: #{simple_brain_forward_fm.1} parent=0 // pred_check
    _
  $region7: #{simple_brain_forward_fm.1} parent=0 // pred_check_branch
    %15 = sbr.rel (0) target = $region9
  $region8: #{simple_brain_forward_fm.1} parent=0 // pred_region
    _
  $region9: #{simple_brain_forward_fm.1} parent=0 // pred_fallthru
    _
  // Predicated region
  $region10: #{simple_brain_forward_fm.1} parent=0 // pred_check
    _
  $region11: #{simple_brain_forward_fm.1} parent=0 // pred_check_branch
    %17 = sbr.rel (0) target = $region13
  $region12: #{simple_brain_forward_fm.1} parent=0 // pred_region
    _
  $region13: #{simple_brain_forward_fm.1} parent=0 // pred_fallthru
    _
  // Predicated region
  $region14: #{simple_brain_forward_fm.1} parent=0 // pred_check
    _
  $region15: #{simple_brain_forward_fm.1} parent=0 // pred_check_branch
    %19 = sbr.rel (0) target = $region17
  $region16: #{simple_brain_forward_fm.1} parent=0 // pred_region
    _
  $region17: #{simple_brain_forward_fm.1} parent=0 // pred_fallthru
    _
  // Predicated region
  $region18: #{simple_brain_forward_fm.1} parent=0 // pred_check
    _
  $region19: #{simple_brain_forward_fm.1} parent=0 // pred_check_branch
    %21 = sbr.rel (0) target = $region21
  $region20: #{simple_brain_forward_fm.1} parent=0 // pred_region
    _
  $region21: #{simple_brain_forward_fm.1} parent=0 // pred_fallthru
    _
  %v22 = vld [vmem:[%s0] sm:$0xff]
  %v23 = vld [vmem:[%s0 + $0x8] sm:$0x7f]
  %v24 = vld [vmem:[%s1] sm:$0xff]
  %v25 = vld [vmem:[%s2] sm:$0xff]
  %27 = vset.pattern.permute.xlu0 0
  %28 = vperm.xlu0 %27, %v25
  %v29 = vpop.permute.xlu0 %28
  %vm31 = vcmask 121856
  %v33 = vsel %vm31, %v24, 0
  %vm35 = vcmask 1046528
  %v37 = vsel %vm35, %v23, 0
  %39 = vmatprep.subr.mxu0 0.0
  %v40 = vand.u32 %v22, 4294901760
  %41 = vmatpush1.msra.mxu0 %v40
  %42 = vmatprep.subr.mxu0 0.0
  %v43 = vand.u32 %v37, 4294901760
  %44 = vmatpush1.msra.mxu0 %v43
  %45 = vmatprep.subr.mxu0 0.0
  %46 = vmatpush1.msra.mxu0 0.0
  %47 = vmatprep.subr.mxu0 0.0
  %48 = vmatpush1.msra.mxu0 0.0
  %49 = vmatprep.subr.mxu0 0.0
  %50 = vmatpush1.msra.mxu0 0.0
  %51 = vmatprep.subr.mxu0 0.0
  %52 = vmatpush1.msra.mxu0 0.0
  %53 = vmatprep.subr.mxu0 0.0
  %54 = vmatpush1.msra.mxu0 0.0
  %55 = vmatprep.subr.mxu0 0.0
  %56 = vmatpush1.msra.mxu0 0.0
  %57 = vmatprep.subr.mxu0 0.0
  %58 = vmatpush1.msra.mxu0 0.0
  %59 = vmatprep.subr.mxu0 0.0
  %60 = vmatpush1.msra.mxu0 0.0
  %61 = vmatprep.subr.mxu0 0.0
  %62 = vmatpush1.msra.mxu0 0.0
  %63 = vmatprep.subr.mxu0 0.0
  %64 = vmatpush1.msra.mxu0 0.0
  %65 = vmatprep.subr.mxu0 0.0
  %66 = vmatpush1.msra.mxu0 0.0
  %67 = vmatprep.subr.mxu0 0.0
  %68 = vmatpush1.msra.mxu0 0.0
  %69 = vmatprep.subr.mxu0 0.0
  %70 = vmatpush1.msra.mxu0 0.0
  %71 = vmatprep.subr.mxu0 0.0
  %72 = vmatpush1.msra.mxu0 0.0
  %73 = vmatprep.subr.mxu0 0.0
  %74 = vmatpush1.msra.mxu0 0.0
  %75 = vmatprep.subr.mxu0 0.0
  %76 = vmatpush1.msra.mxu0 0.0
  %77 = vmatprep.subr.mxu0 0.0
  %78 = vmatpush1.msra.mxu0 0.0
  %79 = vmatprep.subr.mxu0 0.0
  %80 = vmatpush1.msra.mxu0 0.0
  %81 = vmatprep.subr.mxu0 0.0
  %82 = vmatpush1.msra.mxu0 0.0
  %83 = vmatprep.subr.mxu0 0.0
  %84 = vmatpush1.msra.mxu0 0.0
  %85 = vmatprep.subr.mxu0 0.0
  %86 = vmatpush1.msra.mxu0 0.0
  %87 = vmatprep.subr.mxu0 0.0
  %88 = vmatpush1.msra.mxu0 0.0
  %89 = vmatprep.subr.mxu0 0.0
  %90 = vmatpush1.msra.mxu0 0.0
  %91 = vmatprep.subr.mxu0 0.0
  %92 = vmatpush1.msra.mxu0 0.0
  %93 = vmatprep.subr.mxu0 0.0
  %94 = vmatpush1.msra.mxu0 0.0
  %95 = vmatprep.subr.mxu0 0.0
  %96 = vmatpush1.msra.mxu0 0.0
  %97 = vmatprep.subr.mxu0 0.0
  %98 = vmatpush1.msra.mxu0 0.0
  %99 = vmatprep.subr.mxu0 0.0
  %100 = vmatpush1.msra.mxu0 0.0
  %101 = vmatprep.subr.mxu0 0.0
  %102 = vmatpush1.msra.mxu0 0.0
  %103 = vmatprep.subr.mxu0 0.0
  %104 = vmatpush1.msra.mxu0 0.0
  %105 = vmatprep.mubr.f32.mxu0 0.0
  %v106 = vand.u32 %v33, 4294901760
  %v107 = vsub.f32 %v33, %v106
  %v108 = vand.u32 %v107, 4294901760
  %v109 = vsub.f32 %v107, %v108
  %v110 = vand.u32 %v109, 4294901760
  %111 = vmatmul.mubr.f32.gmra.mrb[0].mxu0 %v110
  %v112 = vpop.f32.mrb[0].mxu0
  %v113 = vadd.f32 %v29, %v112
  %v114 = vpop.f32.mrb[0].mxu0
  %115 = vdwg.mxu0
  %116 = vmatprep.subr.mxu0 0.0
  %v117 = vand.u32 %v22, 4294901760
  %v118 = vsub.f32 %v22, %v117
  %v119 = vand.u32 %v118, 4294901760
  %v120 = vsub.f32 %v118, %v119
  %v121 = vand.u32 %v120, 4294901760
  %122 = vmatpush1.msra.mxu0 %v121
  %123 = vmatprep.subr.mxu0 0.0
  %v124 = vand.u32 %v37, 4294901760
  %v125 = vsub.f32 %v37, %v124
  %v126 = vand.u32 %v125, 4294901760
  %v127 = vsub.f32 %v125, %v126
  %v128 = vand.u32 %v127, 4294901760
  %129 = vmatpush1.msra.mxu0 %v128
  %130 = vmatprep.subr.mxu0 0.0
  %131 = vmatpush1.msra.mxu0 0.0
  %132 = vmatprep.subr.mxu0 0.0
  %133 = vmatpush1.msra.mxu0 0.0
  %134 = vmatprep.subr.mxu0 0.0
  %135 = vmatpush1.msra.mxu0 0.0
  %136 = vmatprep.subr.mxu0 0.0
  %137 = vmatpush1.msra.mxu0 0.0
  %138 = vmatprep.subr.mxu0 0.0
  %139 = vmatpush1.msra.mxu0 0.0
  %140 = vmatprep.subr.mxu0 0.0
  %141 = vmatpush1.msra.mxu0 0.0
  %142 = vmatprep.subr.mxu0 0.0
  %143 = vmatpush1.msra.mxu0 0.0
  %144 = vmatprep.subr.mxu0 0.0
  %145 = vmatpush1.msra.mxu0 0.0
  %146 = vmatprep.subr.mxu0 0.0
  %147 = vmatpush1.msra.mxu0 0.0
  %148 = vmatprep.subr.mxu0 0.0
  %149 = vmatpush1.msra.mxu0 0.0
  %150 = vmatprep.subr.mxu0 0.0
  %151 = vmatpush1.msra.mxu0 0.0
  %152 = vmatprep.subr.mxu0 0.0
  %153 = vmatpush1.msra.mxu0 0.0
  %154 = vmatprep.subr.mxu0 0.0
  %155 = vmatpush1.msra.mxu0 0.0
  %156 = vmatprep.subr.mxu0 0.0
  %157 = vmatpush1.msra.mxu0 0.0
  %158 = vmatprep.subr.mxu0 0.0
  %159 = vmatpush1.msra.mxu0 0.0
  %160 = vmatprep.subr.mxu0 0.0
  %161 = vmatpush1.msra.mxu0 0.0
  %162 = vmatprep.subr.mxu0 0.0
  %163 = vmatpush1.msra.mxu0 0.0
  %164 = vmatprep.subr.mxu0 0.0
  %165 = vmatpush1.msra.mxu0 0.0
  %166 = vmatprep.subr.mxu0 0.0
  %167 = vmatpush1.msra.mxu0 0.0
  %168 = vmatprep.subr.mxu0 0.0
  %169 = vmatpush1.msra.mxu0 0.0
  %170 = vmatprep.subr.mxu0 0.0
  %171 = vmatpush1.msra.mxu0 0.0
  %172 = vmatprep.subr.mxu0 0.0
  %173 = vmatpush1.msra.mxu0 0.0
  %174 = vmatprep.subr.mxu0 0.0
  %175 = vmatpush1.msra.mxu0 0.0
  %176 = vmatprep.subr.mxu0 0.0
  %177 = vmatpush1.msra.mxu0 0.0
  %178 = vmatprep.subr.mxu0 0.0
  %179 = vmatpush1.msra.mxu0 0.0
  %180 = vmatprep.subr.mxu0 0.0
  %181 = vmatpush1.msra.mxu0 0.0
  %182 = vmatprep.subr.mxu0 0.0
  %183 = vmatpush1.msra.mxu0 0.0
  %184 = vmatprep.subr.mxu0 0.0
  %185 = vmatpush1.msra.mxu0 0.0
  %186 = vmatprep.subr.mxu0 0.0
  %187 = vmatpush1.msra.mxu0 0.0
  %188 = vmatprep.subr.mxu0 0.0
  %189 = vmatpush1.msra.mxu0 0.0
  %190 = vmatprep.mubr.f32.mxu0 0.0
  %v191 = vand.u32 %v33, 4294901760
  %192 = vmatmul.mubr.f32.gmra.mrb[0].mxu0 %v191
  %v193 = vpop.f32.mrb[0].mxu0
  %v194 = vadd.f32 %v113, %v193
  %v195 = vpop.f32.mrb[0].mxu0
  %196 = vdwg.mxu0
  %197 = vmatprep.subr.mxu0 0.0
  %v198 = vand.u32 %v22, 4294901760
  %v199 = vsub.f32 %v22, %v198
  %200 = vmatpush1.msra.mxu0 %v199
  %201 = vmatprep.subr.mxu0 0.0
  %v202 = vand.u32 %v37, 4294901760
  %v203 = vsub.f32 %v37, %v202
  %204 = vmatpush1.msra.mxu0 %v203
  %205 = vmatprep.subr.mxu0 0.0
  %206 = vmatpush1.msra.mxu0 0.0
  %207 = vmatprep.subr.mxu0 0.0
  %208 = vmatpush1.msra.mxu0 0.0
  %209 = vmatprep.subr.mxu0 0.0
  %210 = vmatpush1.msra.mxu0 0.0
  %211 = vmatprep.subr.mxu0 0.0
  %212 = vmatpush1.msra.mxu0 0.0
  %213 = vmatprep.subr.mxu0 0.0
  %214 = vmatpush1.msra.mxu0 0.0
  %215 = vmatprep.subr.mxu0 0.0
  %216 = vmatpush1.msra.mxu0 0.0
  %217 = vmatprep.subr.mxu0 0.0
  %218 = vmatpush1.msra.mxu0 0.0
  %219 = vmatprep.subr.mxu0 0.0
  %220 = vmatpush1.msra.mxu0 0.0
  %221 = vmatprep.subr.mxu0 0.0
  %222 = vmatpush1.msra.mxu0 0.0
  %223 = vmatprep.subr.mxu0 0.0
  %224 = vmatpush1.msra.mxu0 0.0
  %225 = vmatprep.subr.mxu0 0.0
  %226 = vmatpush1.msra.mxu0 0.0
  %227 = vmatprep.subr.mxu0 0.0
  %228 = vmatpush1.msra.mxu0 0.0
  %229 = vmatprep.subr.mxu0 0.0
  %230 = vmatpush1.msra.mxu0 0.0
  %231 = vmatprep.subr.mxu0 0.0
  %232 = vmatpush1.msra.mxu0 0.0
  %233 = vmatprep.subr.mxu0 0.0
  %234 = vmatpush1.msra.mxu0 0.0
  %235 = vmatprep.subr.mxu0 0.0
  %236 = vmatpush1.msra.mxu0 0.0
  %237 = vmatprep.subr.mxu0 0.0
  %238 = vmatpush1.msra.mxu0 0.0
  %239 = vmatprep.subr.mxu0 0.0
  %240 = vmatpush1.msra.mxu0 0.0
  %241 = vmatprep.subr.mxu0 0.0
  %242 = vmatpush1.msra.mxu0 0.0
  %243 = vmatprep.subr.mxu0 0.0
  %244 = vmatpush1.msra.mxu0 0.0
  %245 = vmatprep.subr.mxu0 0.0
  %246 = vmatpush1.msra.mxu0 0.0
  %247 = vmatprep.subr.mxu0 0.0
  %248 = vmatpush1.msra.mxu0 0.0
  %249 = vmatprep.subr.mxu0 0.0
  %250 = vmatpush1.msra.mxu0 0.0
  %251 = vmatprep.subr.mxu0 0.0
  %252 = vmatpush1.msra.mxu0 0.0
  %253 = vmatprep.subr.mxu0 0.0
  %254 = vmatpush1.msra.mxu0 0.0
  %255 = vmatprep.subr.mxu0 0.0
  %256 = vmatpush1.msra.mxu0 0.0
  %257 = vmatprep.subr.mxu0 0.0
  %258 = vmatpush1.msra.mxu0 0.0
  %259 = vmatprep.subr.mxu0 0.0
  %260 = vmatpush1.msra.mxu0 0.0
  %261 = vmatprep.subr.mxu0 0.0
  %262 = vmatpush1.msra.mxu0 0.0
  %263 = vmatprep.subr.mxu0 0.0
  %264 = vmatpush1.msra.mxu0 0.0
  %265 = vmatprep.mubr.f32.mxu0 0.0
  %v266 = vand.u32 %v33, 4294901760
  %v267 = vsub.f32 %v33, %v266
  %268 = vmatmul.mubr.f32.gmra.mrb[0].mxu0 %v267
  %v269 = vpop.f32.mrb[0].mxu0
  %v270 = vadd.f32 %v194, %v269
  %v271 = vpop.f32.mrb[0].mxu0
  %272 = vdwg.mxu0
  %273 = vmatprep.subr.mxu0 0.0
  %v274 = vand.u32 %v22, 4294901760
  %275 = vmatpush1.msra.mxu0 %v274
  %276 = vmatprep.subr.mxu0 0.0
  %v277 = vand.u32 %v37, 4294901760
  %278 = vmatpush1.msra.mxu0 %v277
  %279 = vmatprep.subr.mxu0 0.0
  %280 = vmatpush1.msra.mxu0 0.0
  %281 = vmatprep.subr.mxu0 0.0
  %282 = vmatpush1.msra.mxu0 0.0
  %283 = vmatprep.subr.mxu0 0.0
  %284 = vmatpush1.msra.mxu0 0.0
  %285 = vmatprep.subr.mxu0 0.0
  %286 = vmatpush1.msra.mxu0 0.0
  %287 = vmatprep.subr.mxu0 0.0
  %288 = vmatpush1.msra.mxu0 0.0
  %289 = vmatprep.subr.mxu0 0.0
  %290 = vmatpush1.msra.mxu0 0.0
  %291 = vmatprep.subr.mxu0 0.0
  %292 = vmatpush1.msra.mxu0 0.0
  %293 = vmatprep.subr.mxu0 0.0
  %294 = vmatpush1.msra.mxu0 0.0
  %295 = vmatprep.subr.mxu0 0.0
  %296 = vmatpush1.msra.mxu0 0.0
  %297 = vmatprep.subr.mxu0 0.0
  %298 = vmatpush1.msra.mxu0 0.0
  %299 = vmatprep.subr.mxu0 0.0
  %300 = vmatpush1.msra.mxu0 0.0
  %301 = vmatprep.subr.mxu0 0.0
  %302 = vmatpush1.msra.mxu0 0.0
  %303 = vmatprep.subr.mxu0 0.0
  %304 = vmatpush1.msra.mxu0 0.0
  %305 = vmatprep.subr.mxu0 0.0
  %306 = vmatpush1.msra.mxu0 0.0
  %307 = vmatprep.subr.mxu0 0.0
  %308 = vmatpush1.msra.mxu0 0.0
  %309 = vmatprep.subr.mxu0 0.0
  %310 = vmatpush1.msra.mxu0 0.0
  %311 = vmatprep.subr.mxu0 0.0
  %312 = vmatpush1.msra.mxu0 0.0
  %313 = vmatprep.subr.mxu0 0.0
  %314 = vmatpush1.msra.mxu0 0.0
  %315 = vmatprep.subr.mxu0 0.0
  %316 = vmatpush1.msra.mxu0 0.0
  %317 = vmatprep.subr.mxu0 0.0
  %318 = vmatpush1.msra.mxu0 0.0
  %319 = vmatprep.subr.mxu0 0.0
  %320 = vmatpush1.msra.mxu0 0.0
  %321 = vmatprep.subr.mxu0 0.0
  %322 = vmatpush1.msra.mxu0 0.0
  %323 = vmatprep.subr.mxu0 0.0
  %324 = vmatpush1.msra.mxu0 0.0
  %325 = vmatprep.subr.mxu0 0.0
  %326 = vmatpush1.msra.mxu0 0.0
  %327 = vmatprep.subr.mxu0 0.0
  %328 = vmatpush1.msra.mxu0 0.0
  %329 = vmatprep.subr.mxu0 0.0
  %330 = vmatpush1.msra.mxu0 0.0
  %331 = vmatprep.subr.mxu0 0.0
  %332 = vmatpush1.msra.mxu0 0.0
  %333 = vmatprep.subr.mxu0 0.0
  %334 = vmatpush1.msra.mxu0 0.0
  %335 = vmatprep.subr.mxu0 0.0
  %336 = vmatpush1.msra.mxu0 0.0
  %337 = vmatprep.subr.mxu0 0.0
  %338 = vmatpush1.msra.mxu0 0.0
  %339 = vmatprep.mubr.f32.mxu0 0.0
  %v340 = vand.u32 %v33, 4294901760
  %v341 = vsub.f32 %v33, %v340
  %v342 = vand.u32 %v341, 4294901760
  %343 = vmatmul.mubr.f32.gmra.mrb[0].mxu0 %v342
  %v344 = vpop.f32.mrb[0].mxu0
  %v345 = vadd.f32 %v270, %v344
  %v346 = vpop.f32.mrb[0].mxu0
  %347 = vdwg.mxu0
  %348 = vmatprep.subr.mxu0 0.0
  %v349 = vand.u32 %v22, 4294901760
  %v350 = vsub.f32 %v22, %v349
  %v351 = vand.u32 %v350, 4294901760
  %352 = vmatpush1.msra.mxu0 %v351
  %353 = vmatprep.subr.mxu0 0.0
  %v354 = vand.u32 %v37, 4294901760
  %v355 = vsub.f32 %v37, %v354
  %v356 = vand.u32 %v355, 4294901760
  %357 = vmatpush1.msra.mxu0 %v356
  %358 = vmatprep.subr.mxu0 0.0
  %359 = vmatpush1.msra.mxu0 0.0
  %360 = vmatprep.subr.mxu0 0.0
  %361 = vmatpush1.msra.mxu0 0.0
  %362 = vmatprep.subr.mxu0 0.0
  %363 = vmatpush1.msra.mxu0 0.0
  %364 = vmatprep.subr.mxu0 0.0
  %365 = vmatpush1.msra.mxu0 0.0
  %366 = vmatprep.subr.mxu0 0.0
  %367 = vmatpush1.msra.mxu0 0.0
  %368 = vmatprep.subr.mxu0 0.0
  %369 = vmatpush1.msra.mxu0 0.0
  %370 = vmatprep.subr.mxu0 0.0
  %371 = vmatpush1.msra.mxu0 0.0
  %372 = vmatprep.subr.mxu0 0.0
  %373 = vmatpush1.msra.mxu0 0.0
  %374 = vmatprep.subr.mxu0 0.0
  %375 = vmatpush1.msra.mxu0 0.0
  %376 = vmatprep.subr.mxu0 0.0
  %377 = vmatpush1.msra.mxu0 0.0
  %378 = vmatprep.subr.mxu0 0.0
  %379 = vmatpush1.msra.mxu0 0.0
  %380 = vmatprep.subr.mxu0 0.0
  %381 = vmatpush1.msra.mxu0 0.0
  %382 = vmatprep.subr.mxu0 0.0
  %383 = vmatpush1.msra.mxu0 0.0
  %384 = vmatprep.subr.mxu0 0.0
  %385 = vmatpush1.msra.mxu0 0.0
  %386 = vmatprep.subr.mxu0 0.0
  %387 = vmatpush1.msra.mxu0 0.0
  %388 = vmatprep.subr.mxu0 0.0
  %389 = vmatpush1.msra.mxu0 0.0
  %390 = vmatprep.subr.mxu0 0.0
  %391 = vmatpush1.msra.mxu0 0.0
  %392 = vmatprep.subr.mxu0 0.0
  %393 = vmatpush1.msra.mxu0 0.0
  %394 = vmatprep.subr.mxu0 0.0
  %395 = vmatpush1.msra.mxu0 0.0
  %396 = vmatprep.subr.mxu0 0.0
  %397 = vmatpush1.msra.mxu0 0.0
  %398 = vmatprep.subr.mxu0 0.0
  %399 = vmatpush1.msra.mxu0 0.0
  %400 = vmatprep.subr.mxu0 0.0
  %401 = vmatpush1.msra.mxu0 0.0
  %402 = vmatprep.subr.mxu0 0.0
  %403 = vmatpush1.msra.mxu0 0.0
  %404 = vmatprep.subr.mxu0 0.0
  %405 = vmatpush1.msra.mxu0 0.0
  %406 = vmatprep.subr.mxu0 0.0
  %407 = vmatpush1.msra.mxu0 0.0
  %408 = vmatprep.subr.mxu0 0.0
  %409 = vmatpush1.msra.mxu0 0.0
  %410 = vmatprep.subr.mxu0 0.0
  %411 = vmatpush1.msra.mxu0 0.0
  %412 = vmatprep.subr.mxu0 0.0
  %413 = vmatpush1.msra.mxu0 0.0
  %414 = vmatprep.subr.mxu0 0.0
  %415 = vmatpush1.msra.mxu0 0.0
  %416 = vmatprep.subr.mxu0 0.0
  %417 = vmatpush1.msra.mxu0 0.0
  %418 = vmatprep.mubr.f32.mxu0 0.0
  %v419 = vand.u32 %v33, 4294901760
  %420 = vmatmul.mubr.f32.gmra.mrb[0].mxu0 %v419
  %v421 = vpop.f32.mrb[0].mxu0
  %v422 = vadd.f32 %v345, %v421
  %v423 = vpop.f32.mrb[0].mxu0
  %424 = vdwg.mxu0
  %425 = vmatprep.subr.mxu0 0.0
  %v426 = vand.u32 %v22, 4294901760
  %427 = vmatpush1.msra.mxu0 %v426
  %428 = vmatprep.subr.mxu0 0.0
  %v429 = vand.u32 %v37, 4294901760
  %430 = vmatpush1.msra.mxu0 %v429
  %431 = vmatprep.subr.mxu0 0.0
  %432 = vmatpush1.msra.mxu0 0.0
  %433 = vmatprep.subr.mxu0 0.0
  %434 = vmatpush1.msra.mxu0 0.0
  %435 = vmatprep.subr.mxu0 0.0
  %436 = vmatpush1.msra.mxu0 0.0
  %437 = vmatprep.subr.mxu0 0.0
  %438 = vmatpush1.msra.mxu0 0.0
  %439 = vmatprep.subr.mxu0 0.0
  %440 = vmatpush1.msra.mxu0 0.0
  %441 = vmatprep.subr.mxu0 0.0
  %442 = vmatpush1.msra.mxu0 0.0
  %443 = vmatprep.subr.mxu0 0.0
  %444 = vmatpush1.msra.mxu0 0.0
  %445 = vmatprep.subr.mxu0 0.0
  %446 = vmatpush1.msra.mxu0 0.0
  %447 = vmatprep.subr.mxu0 0.0
  %448 = vmatpush1.msra.mxu0 0.0
  %449 = vmatprep.subr.mxu0 0.0
  %450 = vmatpush1.msra.mxu0 0.0
  %451 = vmatprep.subr.mxu0 0.0
  %452 = vmatpush1.msra.mxu0 0.0
  %453 = vmatprep.subr.mxu0 0.0
  %454 = vmatpush1.msra.mxu0 0.0
  %455 = vmatprep.subr.mxu0 0.0
  %456 = vmatpush1.msra.mxu0 0.0
  %457 = vmatprep.subr.mxu0 0.0
  %458 = vmatpush1.msra.mxu0 0.0
  %459 = vmatprep.subr.mxu0 0.0
  %460 = vmatpush1.msra.mxu0 0.0
  %461 = vmatprep.subr.mxu0 0.0
  %462 = vmatpush1.msra.mxu0 0.0
  %463 = vmatprep.subr.mxu0 0.0
  %464 = vmatpush1.msra.mxu0 0.0
  %465 = vmatprep.subr.mxu0 0.0
  %466 = vmatpush1.msra.mxu0 0.0
  %467 = vmatprep.subr.mxu0 0.0
  %468 = vmatpush1.msra.mxu0 0.0
  %469 = vmatprep.subr.mxu0 0.0
  %470 = vmatpush1.msra.mxu0 0.0
  %471 = vmatprep.subr.mxu0 0.0
  %472 = vmatpush1.msra.mxu0 0.0
  %473 = vmatprep.subr.mxu0 0.0
  %474 = vmatpush1.msra.mxu0 0.0
  %475 = vmatprep.subr.mxu0 0.0
  %476 = vmatpush1.msra.mxu0 0.0
  %477 = vmatprep.subr.mxu0 0.0
  %478 = vmatpush1.msra.mxu0 0.0
  %479 = vmatprep.subr.mxu0 0.0
  %480 = vmatpush1.msra.mxu0 0.0
  %481 = vmatprep.subr.mxu0 0.0
  %482 = vmatpush1.msra.mxu0 0.0
  %483 = vmatprep.subr.mxu0 0.0
  %484 = vmatpush1.msra.mxu0 0.0
  %485 = vmatprep.subr.mxu0 0.0
  %486 = vmatpush1.msra.mxu0 0.0
  %487 = vmatprep.subr.mxu0 0.0
  %488 = vmatpush1.msra.mxu0 0.0
  %489 = vmatprep.subr.mxu0 0.0
  %490 = vmatpush1.msra.mxu0 0.0
  %491 = vmatprep.mubr.f32.mxu0 0.0
  %v492 = vand.u32 %v33, 4294901760
  %493 = vmatmul.mubr.f32.gmra.mrb[0].mxu0 %v492
  %v494 = vpop.f32.mrb[0].mxu0
  %v495 = vadd.f32 %v422, %v494
  %v496 = vpop.f32.mrb[0].mxu0
  %497 = vdwg.mxu0
  %v498 = vxor.u32 %v495, 2147483648
  %v499 = vmul.f32 %v498, 1.442695
  %v500 = vpow.pop %v499
  %v501 = vadd.f32 %v500, 1.0
  %v502 = vrcp.pop %v501
  %v503 = vmul.f32 1.0, %v502
  %v504 = vld [vmem:[%s3] sm:$0x7]
  %v505 = vld [vmem:[%s4] sm:$0x7]
  %507 = vset.pattern.permute.xlu0 0
  %508 = vperm.xlu0 %507, %v505
  %v509 = vpop.permute.xlu0 %508
  %vm511 = vcmask 64512
  %v513 = vsel %vm511, %v504, 0
  %515 = vmatprep.subr.mxu0 0.0
  %v516 = vand.u32 %v503, 4294901760
  %517 = vmatpush1.msra.mxu0 %v516
  %518 = vmatprep.subr.mxu0 0.0
  %519 = vmatpush1.msra.mxu0 0.0
  %520 = vmatprep.subr.mxu0 0.0
  %521 = vmatpush1.msra.mxu0 0.0
  %522 = vmatprep.subr.mxu0 0.0
  %523 = vmatpush1.msra.mxu0 0.0
  %524 = vmatprep.subr.mxu0 0.0
  %525 = vmatpush1.msra.mxu0 0.0
  %526 = vmatprep.subr.mxu0 0.0
  %527 = vmatpush1.msra.mxu0 0.0
  %528 = vmatprep.subr.mxu0 0.0
  %529 = vmatpush1.msra.mxu0 0.0
  %530 = vmatprep.subr.mxu0 0.0
  %531 = vmatpush1.msra.mxu0 0.0
  %532 = vmatprep.subr.mxu0 0.0
  %533 = vmatpush1.msra.mxu0 0.0
  %534 = vmatprep.subr.mxu0 0.0
  %535 = vmatpush1.msra.mxu0 0.0
  %536 = vmatprep.subr.mxu0 0.0
  %537 = vmatpush1.msra.mxu0 0.0
  %538 = vmatprep.subr.mxu0 0.0
  %539 = vmatpush1.msra.mxu0 0.0
  %540 = vmatprep.subr.mxu0 0.0
  %541 = vmatpush1.msra.mxu0 0.0
  %542 = vmatprep.subr.mxu0 0.0
  %543 = vmatpush1.msra.mxu0 0.0
  %544 = vmatprep.subr.mxu0 0.0
  %545 = vmatpush1.msra.mxu0 0.0
  %546 = vmatprep.subr.mxu0 0.0
  %547 = vmatpush1.msra.mxu0 0.0
  %548 = vmatprep.subr.mxu0 0.0
  %549 = vmatpush1.msra.mxu0 0.0
  %550 = vmatprep.subr.mxu0 0.0
  %551 = vmatpush1.msra.mxu0 0.0
  %552 = vmatprep.subr.mxu0 0.0
  %553 = vmatpush1.msra.mxu0 0.0
  %554 = vmatprep.subr.mxu0 0.0
  %555 = vmatpush1.msra.mxu0 0.0
  %556 = vmatprep.subr.mxu0 0.0
  %557 = vmatpush1.msra.mxu0 0.0
  %558 = vmatprep.subr.mxu0 0.0
  %559 = vmatpush1.msra.mxu0 0.0
  %560 = vmatprep.subr.mxu0 0.0
  %561 = vmatpush1.msra.mxu0 0.0
  %562 = vmatprep.subr.mxu0 0.0
  %563 = vmatpush1.msra.mxu0 0.0
  %564 = vmatprep.subr.mxu0 0.0
  %565 = vmatpush1.msra.mxu0 0.0
  %566 = vmatprep.subr.mxu0 0.0
  %567 = vmatpush1.msra.mxu0 0.0
  %568 = vmatprep.subr.mxu0 0.0
  %569 = vmatpush1.msra.mxu0 0.0
  %570 = vmatprep.subr.mxu0 0.0
  %571 = vmatpush1.msra.mxu0 0.0
  %572 = vmatprep.subr.mxu0 0.0
  %573 = vmatpush1.msra.mxu0 0.0
  %574 = vmatprep.subr.mxu0 0.0
  %575 = vmatpush1.msra.mxu0 0.0
  %576 = vmatprep.subr.mxu0 0.0
  %577 = vmatpush1.msra.mxu0 0.0
  %578 = vmatprep.subr.mxu0 0.0
  %579 = vmatpush1.msra.mxu0 0.0
  %580 = vmatprep.mubr.f32.mxu0 0.0
  %v581 = vand.u32 %v513, 4294901760
  %v582 = vsub.f32 %v513, %v581
  %v583 = vand.u32 %v582, 4294901760
  %v584 = vsub.f32 %v582, %v583
  %v585 = vand.u32 %v584, 4294901760
  %586 = vmatmul.mubr.f32.gmra.mrb[0].mxu0 %v585
  %v587 = vpop.f32.mrb[0].mxu0
  %v588 = vadd.f32 %v509, %v587
  %v589 = vpop.f32.mrb[0].mxu0
  %590 = vdwg.mxu0
  %591 = vmatprep.subr.mxu0 0.0
  %v592 = vand.u32 %v503, 4294901760
  %v593 = vsub.f32 %v503, %v592
  %v594 = vand.u32 %v593, 4294901760
  %v595 = vsub.f32 %v593, %v594
  %v596 = vand.u32 %v595, 4294901760
  %597 = vmatpush1.msra.mxu0 %v596
  %598 = vmatprep.subr.mxu0 0.0
  %599 = vmatpush1.msra.mxu0 0.0
  %600 = vmatprep.subr.mxu0 0.0
  %601 = vmatpush1.msra.mxu0 0.0
  %602 = vmatprep.subr.mxu0 0.0
  %603 = vmatpush1.msra.mxu0 0.0
  %604 = vmatprep.subr.mxu0 0.0
  %605 = vmatpush1.msra.mxu0 0.0
  %606 = vmatprep.subr.mxu0 0.0
  %607 = vmatpush1.msra.mxu0 0.0
  %608 = vmatprep.subr.mxu0 0.0
  %609 = vmatpush1.msra.mxu0 0.0
  %610 = vmatprep.subr.mxu0 0.0
  %611 = vmatpush1.msra.mxu0 0.0
  %612 = vmatprep.subr.mxu0 0.0
  %613 = vmatpush1.msra.mxu0 0.0
  %614 = vmatprep.subr.mxu0 0.0
  %615 = vmatpush1.msra.mxu0 0.0
  %616 = vmatprep.subr.mxu0 0.0
  %617 = vmatpush1.msra.mxu0 0.0
  %618 = vmatprep.subr.mxu0 0.0
  %619 = vmatpush1.msra.mxu0 0.0
  %620 = vmatprep.subr.mxu0 0.0
  %621 = vmatpush1.msra.mxu0 0.0
  %622 = vmatprep.subr.mxu0 0.0
  %623 = vmatpush1.msra.mxu0 0.0
  %624 = vmatprep.subr.mxu0 0.0
  %625 = vmatpush1.msra.mxu0 0.0
  %626 = vmatprep.subr.mxu0 0.0
  %627 = vmatpush1.msra.mxu0 0.0
  %628 = vmatprep.subr.mxu0 0.0
  %629 = vmatpush1.msra.mxu0 0.0
  %630 = vmatprep.subr.mxu0 0.0
  %631 = vmatpush1.msra.mxu0 0.0
  %632 = vmatprep.subr.mxu0 0.0
  %633 = vmatpush1.msra.mxu0 0.0
  %634 = vmatprep.subr.mxu0 0.0
  %635 = vmatpush1.msra.mxu0 0.0
  %636 = vmatprep.subr.mxu0 0.0
  %637 = vmatpush1.msra.mxu0 0.0
  %638 = vmatprep.subr.mxu0 0.0
  %639 = vmatpush1.msra.mxu0 0.0
  %640 = vmatprep.subr.mxu0 0.0
  %641 = vmatpush1.msra.mxu0 0.0
  %642 = vmatprep.subr.mxu0 0.0
  %643 = vmatpush1.msra.mxu0 0.0
  %644 = vmatprep.subr.mxu0 0.0
  %645 = vmatpush1.msra.mxu0 0.0
  %646 = vmatprep.subr.mxu0 0.0
  %647 = vmatpush1.msra.mxu0 0.0
  %648 = vmatprep.subr.mxu0 0.0
  %649 = vmatpush1.msra.mxu0 0.0
  %650 = vmatprep.subr.mxu0 0.0
  %651 = vmatpush1.msra.mxu0 0.0
  %652 = vmatprep.subr.mxu0 0.0
  %653 = vmatpush1.msra.mxu0 0.0
  %654 = vmatprep.subr.mxu0 0.0
  %655 = vmatpush1.msra.mxu0 0.0
  %656 = vmatprep.subr.mxu0 0.0
  %657 = vmatpush1.msra.mxu0 0.0
  %658 = vmatprep.subr.mxu0 0.0
  %659 = vmatpush1.msra.mxu0 0.0
  %660 = vmatprep.mubr.f32.mxu0 0.0
  %v661 = vand.u32 %v513, 4294901760
  %662 = vmatmul.mubr.f32.gmra.mrb[0].mxu0 %v661
  %v663 = vpop.f32.mrb[0].mxu0
  %v664 = vadd.f32 %v588, %v663
  %v665 = vpop.f32.mrb[0].mxu0
  %666 = vdwg.mxu0
  %667 = vmatprep.subr.mxu0 0.0
  %v668 = vand.u32 %v503, 4294901760
  %v669 = vsub.f32 %v503, %v668
  %670 = vmatpush1.msra.mxu0 %v669
  %671 = vmatprep.subr.mxu0 0.0
  %672 = vmatpush1.msra.mxu0 0.0
  %673 = vmatprep.subr.mxu0 0.0
  %674 = vmatpush1.msra.mxu0 0.0
  %675 = vmatprep.subr.mxu0 0.0
  %676 = vmatpush1.msra.mxu0 0.0
  %677 = vmatprep.subr.mxu0 0.0
  %678 = vmatpush1.msra.mxu0 0.0
  %679 = vmatprep.subr.mxu0 0.0
  %680 = vmatpush1.msra.mxu0 0.0
  %681 = vmatprep.subr.mxu0 0.0
  %682 = vmatpush1.msra.mxu0 0.0
  %683 = vmatprep.subr.mxu0 0.0
  %684 = vmatpush1.msra.mxu0 0.0
  %685 = vmatprep.subr.mxu0 0.0
  %686 = vmatpush1.msra.mxu0 0.0
  %687 = vmatprep.subr.mxu0 0.0
  %688 = vmatpush1.msra.mxu0 0.0
  %689 = vmatprep.subr.mxu0 0.0
  %690 = vmatpush1.msra.mxu0 0.0
  %691 = vmatprep.subr.mxu0 0.0
  %692 = vmatpush1.msra.mxu0 0.0
  %693 = vmatprep.subr.mxu0 0.0
  %694 = vmatpush1.msra.mxu0 0.0
  %695 = vmatprep.subr.mxu0 0.0
  %696 = vmatpush1.msra.mxu0 0.0
  %697 = vmatprep.subr.mxu0 0.0
  %698 = vmatpush1.msra.mxu0 0.0
  %699 = vmatprep.subr.mxu0 0.0
  %700 = vmatpush1.msra.mxu0 0.0
  %701 = vmatprep.subr.mxu0 0.0
  %702 = vmatpush1.msra.mxu0 0.0
  %703 = vmatprep.subr.mxu0 0.0
  %704 = vmatpush1.msra.mxu0 0.0
  %705 = vmatprep.subr.mxu0 0.0
  %706 = vmatpush1.msra.mxu0 0.0
  %707 = vmatprep.subr.mxu0 0.0
  %708 = vmatpush1.msra.mxu0 0.0
  %709 = vmatprep.subr.mxu0 0.0
  %710 = vmatpush1.msra.mxu0 0.0
  %711 = vmatprep.subr.mxu0 0.0
  %712 = vmatpush1.msra.mxu0 0.0
  %713 = vmatprep.subr.mxu0 0.0
  %714 = vmatpush1.msra.mxu0 0.0
  %715 = vmatprep.subr.mxu0 0.0
  %716 = vmatpush1.msra.mxu0 0.0
  %717 = vmatprep.subr.mxu0 0.0
  %718 = vmatpush1.msra.mxu0 0.0
  %719 = vmatprep.subr.mxu0 0.0
  %720 = vmatpush1.msra.mxu0 0.0
  %721 = vmatprep.subr.mxu0 0.0
  %722 = vmatpush1.msra.mxu0 0.0
  %723 = vmatprep.subr.mxu0 0.0
  %724 = vmatpush1.msra.mxu0 0.0
  %725 = vmatprep.subr.mxu0 0.0
  %726 = vmatpush1.msra.mxu0 0.0
  %727 = vmatprep.subr.mxu0 0.0
  %728 = vmatpush1.msra.mxu0 0.0
  %729 = vmatprep.subr.mxu0 0.0
  %730 = vmatpush1.msra.mxu0 0.0
  %731 = vmatprep.subr.mxu0 0.0
  %732 = vmatpush1.msra.mxu0 0.0
  %733 = vmatprep.mubr.f32.mxu0 0.0
  %v734 = vand.u32 %v513, 4294901760
  %v735 = vsub.f32 %v513, %v734
  %736 = vmatmul.mubr.f32.gmra.mrb[0].mxu0 %v735
  %v737 = vpop.f32.mrb[0].mxu0
  %v738 = vadd.f32 %v664, %v737
  %v739 = vpop.f32.mrb[0].mxu0
  %740 = vdwg.mxu0
  %741 = vmatprep.subr.mxu0 0.0
  %v742 = vand.u32 %v503, 4294901760
  %743 = vmatpush1.msra.mxu0 %v742
  %744 = vmatprep.subr.mxu0 0.0
  %745 = vmatpush1.msra.mxu0 0.0
  %746 = vmatprep.subr.mxu0 0.0
  %747 = vmatpush1.msra.mxu0 0.0
  %748 = vmatprep.subr.mxu0 0.0
  %749 = vmatpush1.msra.mxu0 0.0
  %750 = vmatprep.subr.mxu0 0.0
  %751 = vmatpush1.msra.mxu0 0.0
  %752 = vmatprep.subr.mxu0 0.0
  %753 = vmatpush1.msra.mxu0 0.0
  %754 = vmatprep.subr.mxu0 0.0
  %755 = vmatpush1.msra.mxu0 0.0
  %756 = vmatprep.subr.mxu0 0.0
  %757 = vmatpush1.msra.mxu0 0.0
  %758 = vmatprep.subr.mxu0 0.0
  %759 = vmatpush1.msra.mxu0 0.0
  %760 = vmatprep.subr.mxu0 0.0
  %761 = vmatpush1.msra.mxu0 0.0
  %762 = vmatprep.subr.mxu0 0.0
  %763 = vmatpush1.msra.mxu0 0.0
  %764 = vmatprep.subr.mxu0 0.0
  %765 = vmatpush1.msra.mxu0 0.0
  %766 = vmatprep.subr.mxu0 0.0
  %767 = vmatpush1.msra.mxu0 0.0
  %768 = vmatprep.subr.mxu0 0.0
  %769 = vmatpush1.msra.mxu0 0.0
  %770 = vmatprep.subr.mxu0 0.0
  %771 = vmatpush1.msra.mxu0 0.0
  %772 = vmatprep.subr.mxu0 0.0
  %773 = vmatpush1.msra.mxu0 0.0
  %774 = vmatprep.subr.mxu0 0.0
  %775 = vmatpush1.msra.mxu0 0.0
  %776 = vmatprep.subr.mxu0 0.0
  %777 = vmatpush1.msra.mxu0 0.0
  %778 = vmatprep.subr.mxu0 0.0
  %779 = vmatpush1.msra.mxu0 0.0
  %780 = vmatprep.subr.mxu0 0.0
  %781 = vmatpush1.msra.mxu0 0.0
  %782 = vmatprep.subr.mxu0 0.0
  %783 = vmatpush1.msra.mxu0 0.0
  %784 = vmatprep.subr.mxu0 0.0
  %785 = vmatpush1.msra.mxu0 0.0
  %786 = vmatprep.subr.mxu0 0.0
  %787 = vmatpush1.msra.mxu0 0.0
  %788 = vmatprep.subr.mxu0 0.0
  %789 = vmatpush1.msra.mxu0 0.0
  %790 = vmatprep.subr.mxu0 0.0
  %791 = vmatpush1.msra.mxu0 0.0
  %792 = vmatprep.subr.mxu0 0.0
  %793 = vmatpush1.msra.mxu0 0.0
  %794 = vmatprep.subr.mxu0 0.0
  %795 = vmatpush1.msra.mxu0 0.0
  %796 = vmatprep.subr.mxu0 0.0
  %797 = vmatpush1.msra.mxu0 0.0
  %798 = vmatprep.subr.mxu0 0.0
  %799 = vmatpush1.msra.mxu0 0.0
  %800 = vmatprep.subr.mxu0 0.0
  %801 = vmatpush1.msra.mxu0 0.0
  %802 = vmatprep.subr.mxu0 0.0
  %803 = vmatpush1.msra.mxu0 0.0
  %804 = vmatprep.subr.mxu0 0.0
  %805 = vmatpush1.msra.mxu0 0.0
  %806 = vmatprep.mubr.f32.mxu0 0.0
  %v807 = vand.u32 %v513, 4294901760
  %v808 = vsub.f32 %v513, %v807
  %v809 = vand.u32 %v808, 4294901760
  %810 = vmatmul.mubr.f32.gmra.mrb[0].mxu0 %v809
  %v811 = vpop.f32.mrb[0].mxu0
  %v812 = vadd.f32 %v738, %v811
  %v813 = vpop.f32.mrb[0].mxu0
  %814 = vdwg.mxu0
  %815 = vmatprep.subr.mxu0 0.0
  %v816 = vand.u32 %v503, 4294901760
  %v817 = vsub.f32 %v503, %v816
  %v818 = vand.u32 %v817, 4294901760
  %819 = vmatpush1.msra.mxu0 %v818
  %820 = vmatprep.subr.mxu0 0.0
  %821 = vmatpush1.msra.mxu0 0.0
  %822 = vmatprep.subr.mxu0 0.0
  %823 = vmatpush1.msra.mxu0 0.0
  %824 = vmatprep.subr.mxu0 0.0
  %825 = vmatpush1.msra.mxu0 0.0
  %826 = vmatprep.subr.mxu0 0.0
  %827 = vmatpush1.msra.mxu0 0.0
  %828 = vmatprep.subr.mxu0 0.0
  %829 = vmatpush1.msra.mxu0 0.0
  %830 = vmatprep.subr.mxu0 0.0
  %831 = vmatpush1.msra.mxu0 0.0
  %832 = vmatprep.subr.mxu0 0.0
  %833 = vmatpush1.msra.mxu0 0.0
  %834 = vmatprep.subr.mxu0 0.0
  %835 = vmatpush1.msra.mxu0 0.0
  %836 = vmatprep.subr.mxu0 0.0
  %837 = vmatpush1.msra.mxu0 0.0
  %838 = vmatprep.subr.mxu0 0.0
  %839 = vmatpush1.msra.mxu0 0.0
  %840 = vmatprep.subr.mxu0 0.0
  %841 = vmatpush1.msra.mxu0 0.0
  %842 = vmatprep.subr.mxu0 0.0
  %843 = vmatpush1.msra.mxu0 0.0
  %844 = vmatprep.subr.mxu0 0.0
  %845 = vmatpush1.msra.mxu0 0.0
  %846 = vmatprep.subr.mxu0 0.0
  %847 = vmatpush1.msra.mxu0 0.0
  %848 = vmatprep.subr.mxu0 0.0
  %849 = vmatpush1.msra.mxu0 0.0
  %850 = vmatprep.subr.mxu0 0.0
  %851 = vmatpush1.msra.mxu0 0.0
  %852 = vmatprep.subr.mxu0 0.0
  %853 = vmatpush1.msra.mxu0 0.0
  %854 = vmatprep.subr.mxu0 0.0
  %855 = vmatpush1.msra.mxu0 0.0
  %856 = vmatprep.subr.mxu0 0.0
  %857 = vmatpush1.msra.mxu0 0.0
  %858 = vmatprep.subr.mxu0 0.0
  %859 = vmatpush1.msra.mxu0 0.0
  %860 = vmatprep.subr.mxu0 0.0
  %861 = vmatpush1.msra.mxu0 0.0
  %862 = vmatprep.subr.mxu0 0.0
  %863 = vmatpush1.msra.mxu0 0.0
  %864 = vmatprep.subr.mxu0 0.0
  %865 = vmatpush1.msra.mxu0 0.0
  %866 = vmatprep.subr.mxu0 0.0
  %867 = vmatpush1.msra.mxu0 0.0
  %868 = vmatprep.subr.mxu0 0.0
  %869 = vmatpush1.msra.mxu0 0.0
  %870 = vmatprep.subr.mxu0 0.0
  %871 = vmatpush1.msra.mxu0 0.0
  %872 = vmatprep.subr.mxu0 0.0
  %873 = vmatpush1.msra.mxu0 0.0
  %874 = vmatprep.subr.mxu0 0.0
  %875 = vmatpush1.msra.mxu0 0.0
  %876 = vmatprep.subr.mxu0 0.0
  %877 = vmatpush1.msra.mxu0 0.0
  %878 = vmatprep.subr.mxu0 0.0
  %879 = vmatpush1.msra.mxu0 0.0
  %880 = vmatprep.subr.mxu0 0.0
  %881 = vmatpush1.msra.mxu0 0.0
  %882 = vmatprep.mubr.f32.mxu0 0.0
  %v883 = vand.u32 %v513, 4294901760
  %884 = vmatmul.mubr.f32.gmra.mrb[0].mxu0 %v883
  %v885 = vpop.f32.mrb[0].mxu0
  %v886 = vadd.f32 %v812, %v885
  %v887 = vpop.f32.mrb[0].mxu0
  %888 = vdwg.mxu0
  %889 = vmatprep.subr.mxu0 0.0
  %v890 = vand.u32 %v503, 4294901760
  %891 = vmatpush1.msra.mxu0 %v890
  %892 = vmatprep.subr.mxu0 0.0
  %893 = vmatpush1.msra.mxu0 0.0
  %894 = vmatprep.subr.mxu0 0.0
  %895 = vmatpush1.msra.mxu0 0.0
  %896 = vmatprep.subr.mxu0 0.0
  %897 = vmatpush1.msra.mxu0 0.0
  %898 = vmatprep.subr.mxu0 0.0
  %899 = vmatpush1.msra.mxu0 0.0
  %900 = vmatprep.subr.mxu0 0.0
  %901 = vmatpush1.msra.mxu0 0.0
  %902 = vmatprep.subr.mxu0 0.0
  %903 = vmatpush1.msra.mxu0 0.0
  %904 = vmatprep.subr.mxu0 0.0
  %905 = vmatpush1.msra.mxu0 0.0
  %906 = vmatprep.subr.mxu0 0.0
  %907 = vmatpush1.msra.mxu0 0.0
  %908 = vmatprep.subr.mxu0 0.0
  %909 = vmatpush1.msra.mxu0 0.0
  %910 = vmatprep.subr.mxu0 0.0
  %911 = vmatpush1.msra.mxu0 0.0
  %912 = vmatprep.subr.mxu0 0.0
  %913 = vmatpush1.msra.mxu0 0.0
  %914 = vmatprep.subr.mxu0 0.0
  %915 = vmatpush1.msra.mxu0 0.0
  %916 = vmatprep.subr.mxu0 0.0
  %917 = vmatpush1.msra.mxu0 0.0
  %918 = vmatprep.subr.mxu0 0.0
  %919 = vmatpush1.msra.mxu0 0.0
  %920 = vmatprep.subr.mxu0 0.0
  %921 = vmatpush1.msra.mxu0 0.0
  %922 = vmatprep.subr.mxu0 0.0
  %923 = vmatpush1.msra.mxu0 0.0
  %924 = vmatprep.subr.mxu0 0.0
  %925 = vmatpush1.msra.mxu0 0.0
  %926 = vmatprep.subr.mxu0 0.0
  %927 = vmatpush1.msra.mxu0 0.0
  %928 = vmatprep.subr.mxu0 0.0
  %929 = vmatpush1.msra.mxu0 0.0
  %930 = vmatprep.subr.mxu0 0.0
  %931 = vmatpush1.msra.mxu0 0.0
  %932 = vmatprep.subr.mxu0 0.0
  %933 = vmatpush1.msra.mxu0 0.0
  %934 = vmatprep.subr.mxu0 0.0
  %935 = vmatpush1.msra.mxu0 0.0
  %936 = vmatprep.subr.mxu0 0.0
  %937 = vmatpush1.msra.mxu0 0.0
  %938 = vmatprep.subr.mxu0 0.0
  %939 = vmatpush1.msra.mxu0 0.0
  %940 = vmatprep.subr.mxu0 0.0
  %941 = vmatpush1.msra.mxu0 0.0
  %942 = vmatprep.subr.mxu0 0.0
  %943 = vmatpush1.msra.mxu0 0.0
  %944 = vmatprep.subr.mxu0 0.0
  %945 = vmatpush1.msra.mxu0 0.0
  %946 = vmatprep.subr.mxu0 0.0
  %947 = vmatpush1.msra.mxu0 0.0
  %948 = vmatprep.subr.mxu0 0.0
  %949 = vmatpush1.msra.mxu0 0.0
  %950 = vmatprep.subr.mxu0 0.0
  %951 = vmatpush1.msra.mxu0 0.0
  %952 = vmatprep.subr.mxu0 0.0
  %953 = vmatpush1.msra.mxu0 0.0
  %954 = vmatprep.mubr.f32.mxu0 0.0
  %v955 = vand.u32 %v513, 4294901760
  %956 = vmatmul.mubr.f32.gmra.mrb[0].mxu0 %v955
  %v957 = vpop.f32.mrb[0].mxu0
  %v958 = vadd.f32 %v886, %v957
  %v959 = vpop.f32.mrb[0].mxu0
  %960 = vdwg.mxu0
  %v961 = vxor.u32 %v958, 2147483648
  %v962 = vmul.f32 %v961, 1.442695
  %v963 = vpow.pop %v962
  %v964 = vadd.f32 %v963, 1.0
  %v965 = vrcp.pop %v964
  %v966 = vmul.f32 1.0, %v965
  %967 = vst [vmem:[%s5] sm:$0x7] %v966
  %968 = vst [vmem:[%s6] sm:$0xff] %v503
  // Predicated region
  $region22: #{simple_brain_forward_fm.1} parent=0 // pred_check
    _
  $region23: #{simple_brain_forward_fm.1} parent=0 // pred_check_branch
    %970 = sbr.rel (0) target = $region25
  $region24: #{simple_brain_forward_fm.1} parent=0 // pred_region
    _
  $region25: #{simple_brain_forward_fm.1} parent=0 // pred_fallthru
    _
  // Predicated region
  $region26: #{simple_brain_forward_fm.1} parent=0 // pred_check
    _
  $region27: #{simple_brain_forward_fm.1} parent=0 // pred_check_branch
    %972 = sbr.rel (0) target = $region29
  $region28: #{simple_brain_forward_fm.1} parent=0 // pred_region
    _
  $region29: #{simple_brain_forward_fm.1} parent=0 // pred_fallthru
    _
  // Predicated region
  $region30: #{simple_brain_forward_fm.1} parent=0 // pred_check
    _
  $region31: #{simple_brain_forward_fm.1} parent=0 // pred_check_branch
    %974 = sbr.rel (0) target = $region33
  $region32: #{simple_brain_forward_fm.1} parent=0 // pred_region
    _
  $region33: #{simple_brain_forward_fm.1} parent=0 // pred_fallthru
    _
  // Predicated region
  $region34: #{simple_brain_forward_fm.1} parent=0 // pred_check
    _
  $region35: #{simple_brain_forward_fm.1} parent=0 // pred_check_branch
    %976 = sbr.rel (0) target = $region37
  $region36: #{simple_brain_forward_fm.1} parent=0 // pred_region
    _
  $region37: #{simple_brain_forward_fm.1} parent=0 // pred_fallthru
    _

</llo_original>
